<compile_context>
chip_gen: v6e
topology: v6e:2x2x1
jax: 0.10.0
libtpu: 0.0.40
codegen_flags: <defaults>
</compile_context>

<pallas_src>
import functools

import numpy as np
import jax
import jax.numpy as jnp
from jax import lax
from jax.experimental import pallas as pl
from jax.experimental.pallas import tpu as pltpu


_SQRT_HALF = 0.7071067811865476  # 1/sqrt(2)


def _gelu_exact(x):
    # Matches torch.nn.GELU() default (erf formulation); computed in f32.
    return 0.5 * x * (1.0 + lax.erf(x * _SQRT_HALF))


def _latent_decoder_kernel(
    latent_size,
    # inputs
    z_ref,
    w1_ref, b1_ref,                       # fused layer-1 (feat | adj)
    w2f_ref, b2f_ref, w3f_ref, b3f_ref,   # feat MLP layers 2,3 (small, resident)
    w2a_ref, b2a_ref,                     # adj layer 2 (resident)
    w3a_ref, b3a_ref,                     # adj layer 3: streamed column tiles
    # outputs
    feat_out_ref, adj_out_ref,
    # scratch
    g_scratch,
):
    j = pl.program_id(0)

    @pl.when(j == 0)
    def _prefix():
        L = latent_size
        zb = z_ref[...].astype(jnp.bfloat16)

        # Fused layer-1 of both MLPs: [Bp, L] @ [L, 2L]  (+bias, exact GELU).
        h1 = jnp.dot(zb, w1_ref[...], preferred_element_type=jnp.float32)
        h1 = _gelu_exact(h1 + b1_ref[...])
        hf = h1[:, :L].astype(jnp.bfloat16)
        ha = h1[:, L:].astype(jnp.bfloat16)

        # Whole feat MLP (small) — compute and store once.
        h = jnp.dot(hf, w2f_ref[...], preferred_element_type=jnp.float32)
        h = _gelu_exact(h + b2f_ref[...]).astype(jnp.bfloat16)
        feat = jnp.dot(h, w3f_ref[...], preferred_element_type=jnp.float32)
        feat_out_ref[...] = (feat + b3f_ref[...]).astype(feat_out_ref.dtype)

        # Adj prefix g = GELU(GELU(z W1a + b1a) W2a + b2a), kept resident in VMEM.
        g = jnp.dot(ha, w2a_ref[...], preferred_element_type=jnp.float32)
        g = _gelu_exact(g + b2a_ref[...])
        g_scratch[...] = g.astype(jnp.bfloat16)

    # Every grid step: one streamed column tile of the wide adj third layer.
    adj_tile = jnp.dot(g_scratch[...], w3a_ref[...],
                       preferred_element_type=jnp.float32) + b3a_ref[...]
    adj_out_ref[...] = adj_tile.astype(adj_out_ref.dtype)


def _pick_col_tile(adj_dim, max_tile=512):
    """Column-tile width for the streamed w3a blocks (lane-dense, VMEM-friendly)."""
    if adj_dim < 128:
        return adj_dim                       # single full-width tile
    for t in (max_tile, 256, 128):
        if adj_dim % t == 0 and adj_dim // t >= 2:
            return t
    if adj_dim % 128 == 0:
        return 128
    return adj_dim                           # ragged small case: single full tile


def init_params(key, latent_size, num_nodes, num_edge_types, node_feat_size,
                weight_dtype=jnp.bfloat16):
    """torch.nn.Linear-style init: U(-1/sqrt(fan_in), 1/sqrt(fan_in)).

    Weights are stored in bf16 (streamed dtype); biases stay f32.
    Layer-1 of the two MLPs is pre-fused along the output dim.
    """
    feat_dim = num_nodes * node_feat_size
    adj_dim = num_edge_types * num_nodes * num_nodes

    def linear(k, fan_in, fan_out):
        kw, kb = jax.random.split(k)
        bound = 1.0 / np.sqrt(fan_in)
        w = jax.random.uniform(kw, (fan_in, fan_out), jnp.float32, -bound, bound)
        b = jax.random.uniform(kb, (1, fan_out), jnp.float32, -bound, bound)
        return w.astype(weight_dtype), b

    ks = jax.random.split(key, 6)
    w1f, b1f = linear(ks[0], latent_size, latent_size)
    w2f, b2f = linear(ks[1], latent_size, feat_dim)
    w3f, b3f = linear(ks[2], feat_dim, feat_dim)
    w1a, b1a = linear(ks[3], latent_size, latent_size)
    w2a, b2a = linear(ks[4], latent_size, adj_dim)
    w3a, b3a = linear(ks[5], adj_dim, adj_dim)

    return {
        "w1": jnp.concatenate([w1f, w1a], axis=1),   # [L, 2L] fused layer-1
        "b1": jnp.concatenate([b1f, b1a], axis=1),   # [1, 2L]
        "w2f": w2f, "b2f": b2f, "w3f": w3f, "b3f": b3f,
        "w2a": w2a, "b2a": b2a, "w3a": w3a, "b3a": b3a,
    }


def latent_decoder_forward(z, params, num_nodes, num_edge_types, node_feat_size):
    B, latent = z.shape
    feat_dim = num_nodes * node_feat_size
    adj_dim = num_edge_types * num_nodes * num_nodes

    # Pad batch to a multiple of 8 sublanes (unmasked output stores).
    Bp = max(8, ((B + 7) // 8) * 8)
    z_p = z if Bp == B else jnp.zeros((Bp, latent), z.dtype).at[:B].set(z)

    TN = _pick_col_tile(adj_dim)
    nj = pl.cdiv(adj_dim, TN)

    const = lambda j: (0, 0)   # resident block (fetched once, kept in VMEM)
    col = lambda j: (0, j)     # streamed column tile

    kernel = functools.partial(_latent_decoder_kernel, latent)

    feat_p, adj_p = pl.pallas_call(
        kernel,
        out_shape=(
            jax.ShapeDtypeStruct((Bp, feat_dim), jnp.float32),
            jax.ShapeDtypeStruct((Bp, adj_dim), jnp.float32),
        ),
        grid_spec=pltpu.PrefetchScalarGridSpec(
            num_scalar_prefetch=0,
            grid=(nj,),
            in_specs=[
                pl.BlockSpec((Bp, latent), const),            # z
                pl.BlockSpec((latent, 2 * latent), const),    # w1 (fused)
                pl.BlockSpec((1, 2 * latent), const),         # b1
                pl.BlockSpec((latent, feat_dim), const),      # w2f
                pl.BlockSpec((1, feat_dim), const),           # b2f
                pl.BlockSpec((feat_dim, feat_dim), const),    # w3f
                pl.BlockSpec((1, feat_dim), const),           # b3f
                pl.BlockSpec((latent, adj_dim), const),       # w2a
                pl.BlockSpec((1, adj_dim), const),            # b2a
                pl.BlockSpec((adj_dim, TN), col),             # w3a column tile (streamed)
                pl.BlockSpec((1, TN), col),                   # b3a column tile
            ],
            out_specs=(
                pl.BlockSpec((Bp, feat_dim), const),          # feat (written at j==0)
                pl.BlockSpec((Bp, TN), col),                  # adj column tile
            ),
            scratch_shapes=[pltpu.VMEM((Bp, adj_dim), jnp.bfloat16)],  # resident g
        ),
        compiler_params=pltpu.CompilerParams(
            # g / feat are produced at j==0 and reused -> reduction-style axis.
            dimension_semantics=("arbitrary",),
            # Raised scoped-VMEM limit with headroom below v7x's 64 MiB physical.
            vmem_limit_bytes=48 * 1024 * 1024,
        ),
    )(
        z_p,
        params["w1"], params["b1"],
        params["w2f"], params["b2f"], params["w3f"], params["b3f"],
        params["w2a"], params["b2a"], params["w3a"], params["b3a"],
    )

    # Reshape glue (matches torch .view) + adjacency symmetrization.
    node_features = feat_p[:B].reshape(B, num_nodes, node_feat_size)
    adj = adj_p[:B].reshape(B, num_edge_types, num_nodes, num_nodes)
    adj = (adj + jnp.swapaxes(adj, 3, 2)) * 0.5
    # TODO(synk): gumbel_softmax=True path (stochastic hard sampling) not implemented.
    return node_features, adj


def _reference_forward(z, params, num_nodes, num_edge_types, node_feat_size):
    """Pure-JAX reference using the same bf16-weight / f32-accumulate numerics."""
    L = z.shape[1]

    def dot(a, w):
        return jnp.dot(a.astype(w.dtype), w, preferred_element_type=jnp.float32)

    h1 = _gelu_exact(dot(z, params["w1"]) + params["b1"])
    hf, ha = h1[:, :L], h1[:, L:]

    h = _gelu_exact(dot(hf, params["w2f"]) + params["b2f"])
    feat = dot(h, params["w3f"]) + params["b3f"]

    g = _gelu_exact(dot(ha, params["w2a"]) + params["b2a"])
    adj = dot(g, params["w3a"]) + params["b3a"]

    B = z.shape[0]
    feat = feat.reshape(B, num_nodes, node_feat_size)
    adj = adj.reshape(B, num_edge_types, num_nodes, num_nodes)
    adj = (adj + jnp.swapaxes(adj, 3, 2)) * 0.5
    return feat, adj


if __name__ == "__main__":
    latent_size = 32
    num_nodes = 8
    num_edge_types = 4
    node_feat_size = 16
    batch = 2

    key = jax.random.PRNGKey(0)
    k_z, k_p = jax.random.split(key)
    z = jax.random.normal(k_z, (batch, latent_size), jnp.float32)
    params = init_params(k_p, latent_size, num_nodes, num_edge_types, node_feat_size)

    node_features, adj_matrices = latent_decoder_forward(
        z, params, num_nodes, num_edge_types, node_feat_size
    )
    jax.block_until_ready((node_features, adj_matrices))

    # sanity check against pure-JAX reference (same bf16 weights; loose tol for
    # accumulation-order / erf-implementation differences)
    ref_feat, ref_adj = _reference_forward(
        z, params, num_nodes, num_edge_types, node_feat_size
    )
    assert node_features.shape == (batch, num_nodes, node_feat_size)
    assert adj_matrices.shape == (batch, num_edge_types, num_nodes, num_nodes)
    np.testing.assert_allclose(np.asarray(node_features), np.asarray(ref_feat),
                               rtol=1e-2, atol=1e-2)
    np.testing.assert_allclose(np.asarray(adj_matrices), np.asarray(ref_adj),
                               rtol=1e-2, atol=1e-2)

    print("KERNEL_OK")
</pallas_src>

<mosaic_0001>
module attributes {stable_mosaic.version = 11 : i64} {
  func.func @_latent_decoder_kernel(%arg0: i32, %arg1: memref<8x32xf32, #tpu.memory_space<vmem>>, %arg2: memref<32x64xbf16, #tpu.memory_space<vmem>>, %arg3: memref<1x64xf32, #tpu.memory_space<vmem>>, %arg4: memref<32x128xbf16, #tpu.memory_space<vmem>>, %arg5: memref<1x128xf32, #tpu.memory_space<vmem>>, %arg6: memref<128x128xbf16, #tpu.memory_space<vmem>>, %arg7: memref<1x128xf32, #tpu.memory_space<vmem>>, %arg8: memref<32x256xbf16, #tpu.memory_space<vmem>>, %arg9: memref<1x256xf32, #tpu.memory_space<vmem>>, %arg10: memref<256x128xbf16, #tpu.memory_space<vmem>>, %arg11: memref<1x128xf32, #tpu.memory_space<vmem>>, %arg12: memref<8x128xf32, #tpu.memory_space<vmem>>, %arg13: memref<8x128xf32, #tpu.memory_space<vmem>>, %arg14: memref<8x256xbf16, #tpu.memory_space<vmem>>) attributes {dimension_semantics = [#tpu.dimension_semantics<arbitrary>], iteration_bounds = array<i64: 2>, scalar_prefetch = 0 : i64, scratch_operands = 1 : i64, tpu.core_type = #tpu.core_type<tc>, window_params = [{pipeline_mode = #tpu.pipeline_mode<synchronous>, transform_indices = @transform_0, window_bounds = array<i64: 8, 32>}, {pipeline_mode = #tpu.pipeline_mode<synchronous>, transform_indices = @transform_1, window_bounds = array<i64: 32, 64>}, {pipeline_mode = #tpu.pipeline_mode<synchronous>, transform_indices = @transform_2, window_bounds = array<i64: 1, 64>}, {pipeline_mode = #tpu.pipeline_mode<synchronous>, transform_indices = @transform_3, window_bounds = array<i64: 32, 128>}, {pipeline_mode = #tpu.pipeline_mode<synchronous>, transform_indices = @transform_4, window_bounds = array<i64: 1, 128>}, {pipeline_mode = #tpu.pipeline_mode<synchronous>, transform_indices = @transform_5, window_bounds = array<i64: 128, 128>}, {pipeline_mode = #tpu.pipeline_mode<synchronous>, transform_indices = @transform_6, window_bounds = array<i64: 1, 128>}, {pipeline_mode = #tpu.pipeline_mode<synchronous>, transform_indices = @transform_7, window_bounds = array<i64: 32, 256>}, {pipeline_mode = #tpu.pipeline_mode<synchronous>, transform_indices = @transform_8, window_bounds = array<i64: 1, 256>}, {transform_indices = @transform_9, window_bounds = array<i64: 256, 128>}, {transform_indices = @transform_10, window_bounds = array<i64: 1, 128>}, {pipeline_mode = #tpu.pipeline_mode<synchronous>, transform_indices = @transform_11, window_bounds = array<i64: 8, 128>}, {transform_indices = @transform_12, window_bounds = array<i64: 8, 128>}]} {
    %c0_i32 = arith.constant 0 : i32
    %0 = arith.cmpi eq, %arg0, %c0_i32 : i32
    %1 = arith.extui %0 : i1 to i32
    %c0_i32_0 = arith.constant 0 : i32
    %2 = arith.cmpi ne, %1, %c0_i32_0 : i32
    scf.if %2 {
      %c0_8 = arith.constant 0 : index
      %c0_9 = arith.constant 0 : index
      %10 = vector.load %arg1[%c0_8, %c0_9] : memref<8x32xf32, #tpu.memory_space<vmem>>, vector<8x32xf32>
      %11 = arith.truncf %10 : vector<8x32xf32> to vector<8x32xbf16>
      %c0_10 = arith.constant 0 : index
      %c0_11 = arith.constant 0 : index
      %12 = vector.load %arg2[%c0_10, %c0_11] : memref<32x64xbf16, #tpu.memory_space<vmem>>, vector<32x64xbf16>
      %cst_12 = arith.constant dense<0.000000e+00> : vector<8x64xf32>
      %13 = tpu.matmul %11, %12, %cst_12 {dimension_numbers = #tpu.dot_dimension_numbers<[1], [0], [0], [1], [0, 0, 1, 1], [], []>} : vector<8x32xbf16>, vector<32x64xbf16>, vector<8x64xf32> -> vector<8x64xf32>
      %c0_13 = arith.constant 0 : index
      %c0_14 = arith.constant 0 : index
      %14 = vector.load %arg3[%c0_13, %c0_14] : memref<1x64xf32, #tpu.memory_space<vmem>>, vector<1x64xf32>
      %15 = vector.broadcast %14 : vector<1x64xf32> to vector<8x64xf32>
      %16 = arith.addf %13, %15 : vector<8x64xf32>
      %cst_15 = arith.constant 5.000000e-01 : f32
      %17 = vector.broadcast %cst_15 : f32 to vector<8x64xf32>
      %18 = arith.mulf %17, %16 : vector<8x64xf32>
      %cst_16 = arith.constant 0.707106769 : f32
      %19 = vector.broadcast %cst_16 : f32 to vector<8x64xf32>
      %20 = arith.mulf %16, %19 : vector<8x64xf32>
      %21 = math.erf %20 : vector<8x64xf32>
      %cst_17 = arith.constant 1.000000e+00 : f32
      %22 = vector.broadcast %cst_17 : f32 to vector<8x64xf32>
      %23 = arith.addf %22, %21 : vector<8x64xf32>
      %24 = arith.mulf %18, %23 : vector<8x64xf32>
      %25 = vector.extract_strided_slice %24 {offsets = [0, 0], sizes = [8, 32], strides = [1, 1]} : vector<8x64xf32> to vector<8x32xf32>
      %26 = arith.truncf %25 : vector<8x32xf32> to vector<8x32xbf16>
      %27 = vector.extract_strided_slice %24 {offsets = [0, 32], sizes = [8, 32], strides = [1, 1]} : vector<8x64xf32> to vector<8x32xf32>
      %28 = arith.truncf %27 : vector<8x32xf32> to vector<8x32xbf16>
      %c0_18 = arith.constant 0 : index
      %c0_19 = arith.constant 0 : index
      %29 = vector.load %arg4[%c0_18, %c0_19] : memref<32x128xbf16, #tpu.memory_space<vmem>>, vector<32x128xbf16>
      %cst_20 = arith.constant dense<0.000000e+00> : vector<8x128xf32>
      %30 = tpu.matmul %26, %29, %cst_20 {dimension_numbers = #tpu.dot_dimension_numbers<[1], [0], [0], [1], [0, 0, 1, 1], [], []>} : vector<8x32xbf16>, vector<32x128xbf16>, vector<8x128xf32> -> vector<8x128xf32>
      %c0_21 = arith.constant 0 : index
      %c0_22 = arith.constant 0 : index
      %31 = vector.load %arg5[%c0_21, %c0_22] : memref<1x128xf32, #tpu.memory_space<vmem>>, vector<1x128xf32>
      %32 = vector.broadcast %31 : vector<1x128xf32> to vector<8x128xf32>
      %33 = arith.addf %30, %32 : vector<8x128xf32>
      %cst_23 = arith.constant 5.000000e-01 : f32
      %34 = vector.broadcast %cst_23 : f32 to vector<8x128xf32>
      %35 = arith.mulf %34, %33 : vector<8x128xf32>
      %cst_24 = arith.constant 0.707106769 : f32
      %36 = vector.broadcast %cst_24 : f32 to vector<8x128xf32>
      %37 = arith.mulf %33, %36 : vector<8x128xf32>
      %38 = math.erf %37 : vector<8x128xf32>
      %cst_25 = arith.constant 1.000000e+00 : f32
      %39 = vector.broadcast %cst_25 : f32 to vector<8x128xf32>
      %40 = arith.addf %39, %38 : vector<8x128xf32>
      %41 = arith.mulf %35, %40 : vector<8x128xf32>
      %42 = arith.truncf %41 : vector<8x128xf32> to vector<8x128xbf16>
      %c0_26 = arith.constant 0 : index
      %c0_27 = arith.constant 0 : index
      %43 = vector.load %arg6[%c0_26, %c0_27] : memref<128x128xbf16, #tpu.memory_space<vmem>>, vector<128x128xbf16>
      %cst_28 = arith.constant dense<0.000000e+00> : vector<8x128xf32>
      %44 = tpu.matmul %42, %43, %cst_28 {dimension_numbers = #tpu.dot_dimension_numbers<[1], [0], [0], [1], [0, 0, 1, 1], [], []>} : vector<8x128xbf16>, vector<128x128xbf16>, vector<8x128xf32> -> vector<8x128xf32>
      %c0_29 = arith.constant 0 : index
      %c0_30 = arith.constant 0 : index
      %45 = vector.load %arg7[%c0_29, %c0_30] : memref<1x128xf32, #tpu.memory_space<vmem>>, vector<1x128xf32>
      %46 = vector.broadcast %45 : vector<1x128xf32> to vector<8x128xf32>
      %47 = arith.addf %44, %46 : vector<8x128xf32>
      %c0_31 = arith.constant 0 : index
      %c0_32 = arith.constant 0 : index
      %48 = vector.load %arg12[%c0_31, %c0_32] : memref<8x128xf32, #tpu.memory_space<vmem>>, vector<8x128xf32>
      tpu.vector_store %arg12[%c0_31, %c0_32], %47 {strides = array<i32>} : memref<8x128xf32, #tpu.memory_space<vmem>>, vector<8x128xf32>,
      %c0_33 = arith.constant 0 : index
      %c0_34 = arith.constant 0 : index
      %49 = vector.load %arg8[%c0_33, %c0_34] : memref<32x256xbf16, #tpu.memory_space<vmem>>, vector<32x256xbf16>
      %cst_35 = arith.constant dense<0.000000e+00> : vector<8x256xf32>
      %50 = tpu.matmul %28, %49, %cst_35 {dimension_numbers = #tpu.dot_dimension_numbers<[1], [0], [0], [1], [0, 0, 1, 1], [], []>} : vector<8x32xbf16>, vector<32x256xbf16>, vector<8x256xf32> -> vector<8x256xf32>
      %c0_36 = arith.constant 0 : index
      %c0_37 = arith.constant 0 : index
      %51 = vector.load %arg9[%c0_36, %c0_37] : memref<1x256xf32, #tpu.memory_space<vmem>>, vector<1x256xf32>
      %52 = vector.broadcast %51 : vector<1x256xf32> to vector<8x256xf32>
      %53 = arith.addf %50, %52 : vector<8x256xf32>
      %cst_38 = arith.constant 5.000000e-01 : f32
      %54 = vector.broadcast %cst_38 : f32 to vector<8x256xf32>
      %55 = arith.mulf %54, %53 : vector<8x256xf32>
      %cst_39 = arith.constant 0.707106769 : f32
      %56 = vector.broadcast %cst_39 : f32 to vector<8x256xf32>
      %57 = arith.mulf %53, %56 : vector<8x256xf32>
      %58 = math.erf %57 : vector<8x256xf32>
      %cst_40 = arith.constant 1.000000e+00 : f32
      %59 = vector.broadcast %cst_40 : f32 to vector<8x256xf32>
      %60 = arith.addf %59, %58 : vector<8x256xf32>
      %61 = arith.mulf %55, %60 : vector<8x256xf32>
      %62 = arith.truncf %61 : vector<8x256xf32> to vector<8x256xbf16>
      %c0_41 = arith.constant 0 : index
      %c0_42 = arith.constant 0 : index
      %63 = vector.load %arg14[%c0_41, %c0_42] : memref<8x256xbf16, #tpu.memory_space<vmem>>, vector<8x256xbf16>
      tpu.vector_store %arg14[%c0_41, %c0_42], %62 {strides = array<i32>} : memref<8x256xbf16, #tpu.memory_space<vmem>>, vector<8x256xbf16>,
    } else {
    }
    %c0 = arith.constant 0 : index
    %c0_1 = arith.constant 0 : index
    %3 = vector.load %arg14[%c0, %c0_1] : memref<8x256xbf16, #tpu.memory_space<vmem>>, vector<8x256xbf16>
    %c0_2 = arith.constant 0 : index
    %c0_3 = arith.constant 0 : index
    %4 = vector.load %arg10[%c0_2, %c0_3] : memref<256x128xbf16, #tpu.memory_space<vmem>>, vector<256x128xbf16>
    %cst = arith.constant dense<0.000000e+00> : vector<8x128xf32>
    %5 = tpu.matmul %3, %4, %cst {dimension_numbers = #tpu.dot_dimension_numbers<[1], [0], [0], [1], [0, 0, 1, 1], [], []>} : vector<8x256xbf16>, vector<256x128xbf16>, vector<8x128xf32> -> vector<8x128xf32>
    %c0_4 = arith.constant 0 : index
    %c0_5 = arith.constant 0 : index
    %6 = vector.load %arg11[%c0_4, %c0_5] : memref<1x128xf32, #tpu.memory_space<vmem>>, vector<1x128xf32>
    %7 = vector.broadcast %6 : vector<1x128xf32> to vector<8x128xf32>
    %8 = arith.addf %5, %7 : vector<8x128xf32>
    %c0_6 = arith.constant 0 : index
    %c0_7 = arith.constant 0 : index
    %9 = vector.load %arg13[%c0_6, %c0_7] : memref<8x128xf32, #tpu.memory_space<vmem>>, vector<8x128xf32>
    tpu.vector_store %arg13[%c0_6, %c0_7], %8 {strides = array<i32>} : memref<8x128xf32, #tpu.memory_space<vmem>>, vector<8x128xf32>,
    return
  }
  func.func @transform_0(%arg0: i32) -> (i32, i32) {
    %c0_i32 = arith.constant 0 : i32
    %c0_i32_0 = arith.constant 0 : i32
    %c0_i32_1 = arith.constant 0 : i32
    return %c0_i32, %c0_i32_0 : i32, i32
  }
  func.func @transform_1(%arg0: i32) -> (i32, i32) {
    %c0_i32 = arith.constant 0 : i32
    %c0_i32_0 = arith.constant 0 : i32
    %c0_i32_1 = arith.constant 0 : i32
    return %c0_i32, %c0_i32_0 : i32, i32
  }
  func.func @transform_2(%arg0: i32) -> (i32, i32) {
    %c0_i32 = arith.constant 0 : i32
    %c0_i32_0 = arith.constant 0 : i32
    %c0_i32_1 = arith.constant 0 : i32
    return %c0_i32, %c0_i32_0 : i32, i32
  }
  func.func @transform_3(%arg0: i32) -> (i32, i32) {
    %c0_i32 = arith.constant 0 : i32
    %c0_i32_0 = arith.constant 0 : i32
    %c0_i32_1 = arith.constant 0 : i32
    return %c0_i32, %c0_i32_0 : i32, i32
  }
  func.func @transform_4(%arg0: i32) -> (i32, i32) {
    %c0_i32 = arith.constant 0 : i32
    %c0_i32_0 = arith.constant 0 : i32
    %c0_i32_1 = arith.constant 0 : i32
    return %c0_i32, %c0_i32_0 : i32, i32
  }
  func.func @transform_5(%arg0: i32) -> (i32, i32) {
    %c0_i32 = arith.constant 0 : i32
    %c0_i32_0 = arith.constant 0 : i32
    %c0_i32_1 = arith.constant 0 : i32
    return %c0_i32, %c0_i32_0 : i32, i32
  }
  func.func @transform_6(%arg0: i32) -> (i32, i32) {
    %c0_i32 = arith.constant 0 : i32
    %c0_i32_0 = arith.constant 0 : i32
    %c0_i32_1 = arith.constant 0 : i32
    return %c0_i32, %c0_i32_0 : i32, i32
  }
  func.func @transform_7(%arg0: i32) -> (i32, i32) {
    %c0_i32 = arith.constant 0 : i32
    %c0_i32_0 = arith.constant 0 : i32
    %c0_i32_1 = arith.constant 0 : i32
    return %c0_i32, %c0_i32_0 : i32, i32
  }
  func.func @transform_8(%arg0: i32) -> (i32, i32) {
    %c0_i32 = arith.constant 0 : i32
    %c0_i32_0 = arith.constant 0 : i32
    %c0_i32_1 = arith.constant 0 : i32
    return %c0_i32, %c0_i32_0 : i32, i32
  }
  func.func @transform_9(%arg0: i32) -> (i32, i32) {
    %c0_i32 = arith.constant 0 : i32
    %c0_i32_0 = arith.constant 0 : i32
    return %c0_i32, %arg0 : i32, i32
  }
  func.func @transform_10(%arg0: i32) -> (i32, i32) {
    %c0_i32 = arith.constant 0 : i32
    %c0_i32_0 = arith.constant 0 : i32
    return %c0_i32, %arg0 : i32, i32
  }
  func.func @transform_11(%arg0: i32) -> (i32, i32) {
    %c0_i32 = arith.constant 0 : i32
    %c0_i32_0 = arith.constant 0 : i32
    %c0_i32_1 = arith.constant 0 : i32
    return %c0_i32, %c0_i32_0 : i32, i32
  }
  func.func @transform_12(%arg0: i32) -> (i32, i32) {
    %c0_i32 = arith.constant 0 : i32
    %c0_i32_0 = arith.constant 0 : i32
    return %c0_i32, %arg0 : i32, i32
  }
}

</mosaic_0001>

<llo_original>
// kernel: tpu_custom_call.1
$region0: #{tpu_custom_call.1}
  #allocation0 [shape = 'u32[]', space=smem, size = 0x4, offset = 0x4, fixed_abs, tag = 'smem constant byte address 0x4 - core index']
  #allocation1 [shape = 'u32[144,128]{1,0:T(1,128)}', space=vmem, size = 0x12000, scoped, tag = 'internal scratch']
  #allocation2 [shape = 'bf16[8,256]{1,0:T(8,128)(2,1)}', space=vmem, size = 0x1000, scoped, tag = 'scratch operand']
  %s0 = inlined_call_operand.hbm [shape: f32[8,32], index: 0, kind: input, shape index: {}]
  %s1 = inlined_call_operand.hbm [shape: bf16[32,64], index: 1, kind: input, shape index: {}]
  %s2 = inlined_call_operand.vmem [shape: f32[1,64], index: 2, kind: input, shape index: {}]
  %s3 = inlined_call_operand.hbm [shape: bf16[32,128], index: 3, kind: input, shape index: {}]
  %s4 = inlined_call_operand.vmem [shape: f32[1,128], index: 4, kind: input, shape index: {}]
  %s5 = inlined_call_operand.hbm [shape: bf16[128,128], index: 5, kind: input, shape index: {}]
  %s6 = inlined_call_operand.vmem [shape: f32[1,128], index: 6, kind: input, shape index: {}]
  %s7 = inlined_call_operand.hbm [shape: bf16[32,256], index: 7, kind: input, shape index: {}]
  %s8 = inlined_call_operand.vmem [shape: f32[1,256], index: 8, kind: input, shape index: {}]
  %s9 = inlined_call_operand.hbm [shape: bf16[256,256], index: 9, kind: input, shape index: {}]
  %s10 = inlined_call_operand.vmem [shape: f32[1,256], index: 10, kind: input, shape index: {}]
  %s11 = inlined_call_operand.hbm [shape: f32[8,128], index: 11, kind: output, shape index: {0}]
  %s12 = inlined_call_operand.hbm [shape: f32[8,256], index: 12, kind: output, shape index: {1}]
  %13 = xla_tuple %s11, %s12
  %s14 = sld [smem:[#allocation0]]
  $region113: #{tpu_custom_call.1} parent=0
    _
  %s16 = ssub.s32 1, %s14
  %s17 = scalar_select 0, %s16, %s14
  $region1: #{tpu_custom_call.1} parent=0
    #allocation3 [shape = 'u8[4096]{0}', space=vmem, size = 0x1000, scoped, tag = 'input window, operand 0, single buffered']
    #allocation4 [shape = 's32[2]{0}', space=sflag, size = 0x8, scoped, tag = 'scoped memory for tpu_custom_call.1']
    #allocation5 [shape = 's32[2]{0}', space=sflag, size = 0x8, scoped, tag = 'scoped memory for tpu_custom_call.1']
    #allocation6 [shape = 'u8[8192]{0}', space=vmem, size = 0x2000, scoped, tag = 'input window, operand 1, single buffered']
    #allocation7 [shape = 's32[1]{0}', space=sflag, size = 0x4, scoped, tag = 'scoped memory for tpu_custom_call.1']
    #allocation8 [shape = 'u8[8192]{0}', space=vmem, size = 0x2000, scoped, tag = 'input window, operand 3, single buffered']
    #allocation9 [shape = 'u8[32768]{0}', space=vmem, size = 0x8000, scoped, tag = 'input window, operand 5, single buffered']
    #allocation10 [shape = 's32[1]{0}', space=sflag, size = 0x4, scoped, tag = 'scoped memory for tpu_custom_call.1']
    #allocation11 [shape = 'u8[16384]{0}', space=vmem, size = 0x4000, scoped, tag = 'input window, operand 7, single buffered']
    #allocation12 [shape = 'u8[131072]{0}', space=vmem, size = 0x20000, scoped, tag = 'input window, operand 9']
    #allocation13 [shape = 's32[2]{0}', space=sflag, size = 0x8, scoped, tag = 'scoped memory for tpu_custom_call.1']
    #allocation14 [shape = 'u8[4096]{0}', space=vmem, size = 0x1000, scoped, tag = 'output window, operand 0, single buffered']
    #allocation15 [shape = 'u8[8192]{0}', space=vmem, size = 0x2000, scoped, tag = 'output window, operand 1']
    #allocation16 [shape = 's32[2]{0}', space=sflag, size = 0x8, scoped, tag = 'scoped memory for tpu_custom_call.1']
    %18 = vsyncpa [#allocation4], 0
    %19 = vsyncpa [#allocation7], 0
    %20 = vsyncpa [#allocation10], 0
    %21 = vsyncpa [#allocation13], 0
    %s22 = scalar_lea.sflag [#allocation13], 1
    %23 = vsyncpa %s22, 0
    %24 = vsyncpa [#allocation5], 0
    %25 = vsyncpa [#allocation16], 0
    %s26 = scalar_lea.sflag [#allocation16], 1
    %27 = vsyncpa %s26, 0
    loop: start=0, step=1, limit=4
    $region2: #{tpu_custom_call.1} parent=1 // loop_pre_header
      _
    $region3: #{tpu_custom_call.1} parent=1 // loop_header
      %s29 = sphi 0, %s33
      %p30 = scmp.ge.s32.totalorder %s29, 4
      %s37 = sphi 0, %s37
      %s39 = sphi 0, %s37
      %s40 = sphi 0, %s39
      %s54 = sphi 0, %s40
      %s58 = sphi 0, %s58
      %s60 = sphi 0, %s58
      %s61 = sphi 0, %s60
      %s75 = sphi 0, %s61
      %s79 = sphi 0, %s79
      %s81 = sphi 0, %s79
      %s82 = sphi 0, %s81
      %s96 = sphi 0, %s82
      %s100 = sphi 0, %s100
      %s102 = sphi 0, %s100
      %s103 = sphi 0, %s102
      %s117 = sphi 0, %s103
      %s121 = sphi 0, %s121
      %s123 = sphi 0, %s121
      %s124 = sphi 0, %s123
      %s138 = sphi 0, %s124
      %s142 = sphi 0, %s142
      %s144 = sphi 0, %s142
      %s145 = sphi 0, %s144
      %s159 = sphi 0, %s145
      %s163 = sphi 0, %s163
      %s165 = sphi 0, %s163
      %s166 = sphi 0, %s165
      %s180 = sphi 0, %s166
      %s184 = sphi 0, %s184
      %s186 = sphi 0, %s184
      %s187 = sphi 0, %s186
      %s201 = sphi 0, %s187
      %s205 = sphi 0, %s205
      %s207 = sphi 0, %s205
      %s208 = sphi 0, %s207
      %s222 = sphi 0, %s208
      %s228 = sphi 0, %s230
      %s231 = sphi 0, %s228
      %s232 = sphi 0, %s231
      %s248 = sphi 0, %s232
      %s254 = sphi 0, %s256
      %s257 = sphi 0, %s254
      %s258 = sphi 0, %s257
      %s274 = sphi 0, %s258
      %s278 = sphi 0, %s278
      %s280 = sphi 0, %s278
      %s281 = sphi 0, %s280
      %s295 = sphi 0, %s281
      %s301 = sphi 0, %s303
      %s304 = sphi 0, %s301
      %s305 = sphi 0, %s304
      %s321 = sphi 0, %s305
    $region4: #{tpu_custom_call.1} parent=1 // loop_header_branch
      %32 = sbr.rel (%p30) target = $region8
    $region5: #{tpu_custom_call.1} parent=1 // loop_body
      %s34 = ssub.s32 %s29, 1
      %s35 = ssub.s32 %s29, 2
      %s36 = sadd.s32 %s29, 1
      %s38 = sadd.s32 %s37, 1
      %p41 = scmp.eq.s32.totalorder %s29, 1
      %p42 = scmp.ne.s32.totalorder %s37, %s39
      %p43 = scmp.eq.s32.totalorder %s29, 0
      %p44 = por %p42, %p43
      %p45 = scmp.ne.s32.totalorder %s37, %s39
      %p46 = scmp.eq.s32.totalorder %s34, 1
      %p47 = por %p45, %p46
      %p48 = scmp.ne.s32.totalorder %s39, %s40
      %p49 = scmp.eq.s32.totalorder %s34, 0
      %p50 = por %p48, %p49
      %p51 = scmp.ne.s32.totalorder %s39, %s40
      %p52 = scmp.eq.s32.totalorder %s35, 1
      %p53 = por %p51, %p52
      %p55 = scmp.ne.s32.totalorder %s40, %s54
      %p56 = scmp.eq.s32.totalorder %s35, 0
      %p57 = por %p55, %p56
      %s59 = sadd.s32 %s58, 1
      %p62 = scmp.eq.s32.totalorder %s29, 1
      %p63 = scmp.ne.s32.totalorder %s58, %s60
      %p64 = scmp.eq.s32.totalorder %s29, 0
      %p65 = por %p63, %p64
      %p66 = scmp.ne.s32.totalorder %s58, %s60
      %p67 = scmp.eq.s32.totalorder %s34, 1
      %p68 = por %p66, %p67
      %p69 = scmp.ne.s32.totalorder %s60, %s61
      %p70 = scmp.eq.s32.totalorder %s34, 0
      %p71 = por %p69, %p70
      %p72 = scmp.ne.s32.totalorder %s60, %s61
      %p73 = scmp.eq.s32.totalorder %s35, 1
      %p74 = por %p72, %p73
      %p76 = scmp.ne.s32.totalorder %s61, %s75
      %p77 = scmp.eq.s32.totalorder %s35, 0
      %p78 = por %p76, %p77
      %s80 = sadd.s32 %s79, 1
      %p83 = scmp.eq.s32.totalorder %s29, 1
      %p84 = scmp.ne.s32.totalorder %s79, %s81
      %p85 = scmp.eq.s32.totalorder %s29, 0
      %p86 = por %p84, %p85
      %p87 = scmp.ne.s32.totalorder %s79, %s81
      %p88 = scmp.eq.s32.totalorder %s34, 1
      %p89 = por %p87, %p88
      %p90 = scmp.ne.s32.totalorder %s81, %s82
      %p91 = scmp.eq.s32.totalorder %s34, 0
      %p92 = por %p90, %p91
      %p93 = scmp.ne.s32.totalorder %s81, %s82
      %p94 = scmp.eq.s32.totalorder %s35, 1
      %p95 = por %p93, %p94
      %p97 = scmp.ne.s32.totalorder %s82, %s96
      %p98 = scmp.eq.s32.totalorder %s35, 0
      %p99 = por %p97, %p98
      %s101 = sadd.s32 %s100, 1
      %p104 = scmp.eq.s32.totalorder %s29, 1
      %p105 = scmp.ne.s32.totalorder %s100, %s102
      %p106 = scmp.eq.s32.totalorder %s29, 0
      %p107 = por %p105, %p106
      %p108 = scmp.ne.s32.totalorder %s100, %s102
      %p109 = scmp.eq.s32.totalorder %s34, 1
      %p110 = por %p108, %p109
      %p111 = scmp.ne.s32.totalorder %s102, %s103
      %p112 = scmp.eq.s32.totalorder %s34, 0
      %p113 = por %p111, %p112
      %p114 = scmp.ne.s32.totalorder %s102, %s103
      %p115 = scmp.eq.s32.totalorder %s35, 1
      %p116 = por %p114, %p115
      %p118 = scmp.ne.s32.totalorder %s103, %s117
      %p119 = scmp.eq.s32.totalorder %s35, 0
      %p120 = por %p118, %p119
      %s122 = sadd.s32 %s121, 1
      %p125 = scmp.eq.s32.totalorder %s29, 1
      %p126 = scmp.ne.s32.totalorder %s121, %s123
      %p127 = scmp.eq.s32.totalorder %s29, 0
      %p128 = por %p126, %p127
      %p129 = scmp.ne.s32.totalorder %s121, %s123
      %p130 = scmp.eq.s32.totalorder %s34, 1
      %p131 = por %p129, %p130
      %p132 = scmp.ne.s32.totalorder %s123, %s124
      %p133 = scmp.eq.s32.totalorder %s34, 0
      %p134 = por %p132, %p133
      %p135 = scmp.ne.s32.totalorder %s123, %s124
      %p136 = scmp.eq.s32.totalorder %s35, 1
      %p137 = por %p135, %p136
      %p139 = scmp.ne.s32.totalorder %s124, %s138
      %p140 = scmp.eq.s32.totalorder %s35, 0
      %p141 = por %p139, %p140
      %s143 = sadd.s32 %s142, 1
      %p146 = scmp.eq.s32.totalorder %s29, 1
      %p147 = scmp.ne.s32.totalorder %s142, %s144
      %p148 = scmp.eq.s32.totalorder %s29, 0
      %p149 = por %p147, %p148
      %p150 = scmp.ne.s32.totalorder %s142, %s144
      %p151 = scmp.eq.s32.totalorder %s34, 1
      %p152 = por %p150, %p151
      %p153 = scmp.ne.s32.totalorder %s144, %s145
      %p154 = scmp.eq.s32.totalorder %s34, 0
      %p155 = por %p153, %p154
      %p156 = scmp.ne.s32.totalorder %s144, %s145
      %p157 = scmp.eq.s32.totalorder %s35, 1
      %p158 = por %p156, %p157
      %p160 = scmp.ne.s32.totalorder %s145, %s159
      %p161 = scmp.eq.s32.totalorder %s35, 0
      %p162 = por %p160, %p161
      %s164 = sadd.s32 %s163, 1
      %p167 = scmp.eq.s32.totalorder %s29, 1
      %p168 = scmp.ne.s32.totalorder %s163, %s165
      %p169 = scmp.eq.s32.totalorder %s29, 0
      %p170 = por %p168, %p169
      %p171 = scmp.ne.s32.totalorder %s163, %s165
      %p172 = scmp.eq.s32.totalorder %s34, 1
      %p173 = por %p171, %p172
      %p174 = scmp.ne.s32.totalorder %s165, %s166
      %p175 = scmp.eq.s32.totalorder %s34, 0
      %p176 = por %p174, %p175
      %p177 = scmp.ne.s32.totalorder %s165, %s166
      %p178 = scmp.eq.s32.totalorder %s35, 1
      %p179 = por %p177, %p178
      %p181 = scmp.ne.s32.totalorder %s166, %s180
      %p182 = scmp.eq.s32.totalorder %s35, 0
      %p183 = por %p181, %p182
      %s185 = sadd.s32 %s184, 1
      %p188 = scmp.eq.s32.totalorder %s29, 1
      %p189 = scmp.ne.s32.totalorder %s184, %s186
      %p190 = scmp.eq.s32.totalorder %s29, 0
      %p191 = por %p189, %p190
      %p192 = scmp.ne.s32.totalorder %s184, %s186
      %p193 = scmp.eq.s32.totalorder %s34, 1
      %p194 = por %p192, %p193
      %p195 = scmp.ne.s32.totalorder %s186, %s187
      %p196 = scmp.eq.s32.totalorder %s34, 0
      %p197 = por %p195, %p196
      %p198 = scmp.ne.s32.totalorder %s186, %s187
      %p199 = scmp.eq.s32.totalorder %s35, 1
      %p200 = por %p198, %p199
      %p202 = scmp.ne.s32.totalorder %s187, %s201
      %p203 = scmp.eq.s32.totalorder %s35, 0
      %p204 = por %p202, %p203
      %s206 = sadd.s32 %s205, 1
      %p209 = scmp.eq.s32.totalorder %s29, 1
      %p210 = scmp.ne.s32.totalorder %s205, %s207
      %p211 = scmp.eq.s32.totalorder %s29, 0
      %p212 = por %p210, %p211
      %p213 = scmp.ne.s32.totalorder %s205, %s207
      %p214 = scmp.eq.s32.totalorder %s34, 1
      %p215 = por %p213, %p214
      %p216 = scmp.ne.s32.totalorder %s207, %s208
      %p217 = scmp.eq.s32.totalorder %s34, 0
      %p218 = por %p216, %p217
      %p219 = scmp.ne.s32.totalorder %s207, %s208
      %p220 = scmp.eq.s32.totalorder %s35, 1
      %p221 = por %p219, %p220
      %p223 = scmp.ne.s32.totalorder %s208, %s222
      %p224 = scmp.eq.s32.totalorder %s35, 0
      %p225 = por %p223, %p224
      %s226 = ssub.s32 %s29, %s36
      %p227 = scmp.eq.s32.totalorder %s226, 0
      %s229 = sadd.s32 %s228, 1
      %s230 = scalar_select %p227, %s228, %s229
      %p233 = pneg %p227
      %p234 = scmp.eq.s32.totalorder %s29, 1
      %p235 = por %p233, %p234
      %p236 = scmp.ne.s32.totalorder %s228, %s231
      %p237 = scmp.eq.s32.totalorder %s29, 0
      %p238 = por %p236, %p237
      %p239 = scmp.ne.s32.totalorder %s228, %s231
      %p240 = scmp.eq.s32.totalorder %s34, 1
      %p241 = por %p239, %p240
      %p242 = scmp.ne.s32.totalorder %s231, %s232
      %p243 = scmp.eq.s32.totalorder %s34, 0
      %p244 = por %p242, %p243
      %p245 = scmp.ne.s32.totalorder %s231, %s232
      %p246 = scmp.eq.s32.totalorder %s35, 1
      %p247 = por %p245, %p246
      %p249 = scmp.ne.s32.totalorder %s232, %s248
      %p250 = scmp.eq.s32.totalorder %s35, 0
      %p251 = por %p249, %p250
      %s252 = ssub.s32 %s29, %s36
      %p253 = scmp.eq.s32.totalorder %s252, 0
      %s255 = sadd.s32 %s254, 1
      %s256 = scalar_select %p253, %s254, %s255
      %p259 = pneg %p253
      %p260 = scmp.eq.s32.totalorder %s29, 1
      %p261 = por %p259, %p260
      %p262 = scmp.ne.s32.totalorder %s254, %s257
      %p263 = scmp.eq.s32.totalorder %s29, 0
      %p264 = por %p262, %p263
      %p265 = scmp.ne.s32.totalorder %s254, %s257
      %p266 = scmp.eq.s32.totalorder %s34, 1
      %p267 = por %p265, %p266
      %p268 = scmp.ne.s32.totalorder %s257, %s258
      %p269 = scmp.eq.s32.totalorder %s34, 0
      %p270 = por %p268, %p269
      %p271 = scmp.ne.s32.totalorder %s257, %s258
      %p272 = scmp.eq.s32.totalorder %s35, 1
      %p273 = por %p271, %p272
      %p275 = scmp.ne.s32.totalorder %s258, %s274
      %p276 = scmp.eq.s32.totalorder %s35, 0
      %p277 = por %p275, %p276
      %s279 = sadd.s32 %s278, 1
      %p282 = scmp.eq.s32.totalorder %s29, 1
      %p283 = scmp.ne.s32.totalorder %s278, %s280
      %p284 = scmp.eq.s32.totalorder %s29, 0
      %p285 = por %p283, %p284
      %p286 = scmp.ne.s32.totalorder %s278, %s280
      %p287 = scmp.eq.s32.totalorder %s34, 1
      %p288 = por %p286, %p287
      %p289 = scmp.ne.s32.totalorder %s280, %s281
      %p290 = scmp.eq.s32.totalorder %s34, 0
      %p291 = por %p289, %p290
      %p292 = scmp.ne.s32.totalorder %s280, %s281
      %p293 = scmp.eq.s32.totalorder %s35, 1
      %p294 = por %p292, %p293
      %p296 = scmp.ne.s32.totalorder %s281, %s295
      %p297 = scmp.eq.s32.totalorder %s35, 0
      %p298 = por %p296, %p297
      %s299 = ssub.s32 %s29, %s36
      %p300 = scmp.eq.s32.totalorder %s299, 0
      %s302 = sadd.s32 %s301, 1
      %s303 = scalar_select %p300, %s301, %s302
      %p306 = pneg %p300
      %p307 = scmp.eq.s32.totalorder %s29, 1
      %p308 = por %p306, %p307
      %p309 = scmp.ne.s32.totalorder %s301, %s304
      %p310 = scmp.eq.s32.totalorder %s29, 0
      %p311 = por %p309, %p310
      %p312 = scmp.ne.s32.totalorder %s301, %s304
      %p313 = scmp.eq.s32.totalorder %s34, 1
      %p314 = por %p312, %p313
      %p315 = scmp.ne.s32.totalorder %s304, %s305
      %p316 = scmp.eq.s32.totalorder %s34, 0
      %p317 = por %p315, %p316
      %p318 = scmp.ne.s32.totalorder %s304, %s305
      %p319 = scmp.eq.s32.totalorder %s35, 1
      %p320 = por %p318, %p319
      %p322 = scmp.ne.s32.totalorder %s305, %s321
      %p323 = scmp.eq.s32.totalorder %s35, 0
      %p324 = por %p322, %p323
      %p325 = scmp.le.s32.totalorder 1, %s29
      %p326 = scmp.lt.s32.totalorder %s29, 3
      %p327 = pnand %p325, %p326
      %p328 = pneg %p327
      // Predicated region
      $region9: #{tpu_custom_call.1} parent=5 // pred_check
        _
      $region10: #{tpu_custom_call.1} parent=5 // pred_check_branch
        %330 = sbr.rel (%p327) target = $region12
      $region11: #{tpu_custom_call.1} parent=5 // pred_region
        %s331 = ssub.s32 %s29, 1
        // Predicated region
        $region13: #{tpu_custom_call.1} parent=11 // pred_check
          %p332 = pneg %p50
        $region14: #{tpu_custom_call.1} parent=11 // pred_check_branch
          %334 = sbr.rel (%p332) target = $region16
        $region15: #{tpu_custom_call.1} parent=11 // pred_region
          %s336 = ssub.s32 128, 128
          %337 = vsyncadd [#allocation4], %s336
          %s339 = sshll.u32 [#allocation3], 4
          %s340 = int_to_ptr.vmem [resolvable:$true] %s339
          %342 = dma.hbm_to_vmem [thread:$0]  %s0, 128, %s340, [#allocation4]
        $region16: #{tpu_custom_call.1} parent=11 // pred_fallthru
          _
        // Predicated region
        $region17: #{tpu_custom_call.1} parent=11 // pred_check
          %p343 = pneg %p71
        $region18: #{tpu_custom_call.1} parent=11 // pred_check_branch
          %345 = sbr.rel (%p343) target = $region20
        $region19: #{tpu_custom_call.1} parent=11 // pred_region
          %s347 = ssub.s32 256, 256
          %348 = vsyncadd [#allocation7], %s347
          %s349 = sshll.u32 [#allocation6], 4
          %s350 = int_to_ptr.vmem [resolvable:$true] %s349
          %355 = dma.hbm_to_vmem [thread:$0]  %s1, 256, %s350, [#allocation7], 64, 64, 4
        $region20: #{tpu_custom_call.1} parent=11 // pred_fallthru
          _
        // Predicated region
        $region21: #{tpu_custom_call.1} parent=11 // pred_check
          %p356 = pneg %p92
        $region22: #{tpu_custom_call.1} parent=11 // pred_check_branch
          %358 = sbr.rel (%p356) target = $region24
        $region23: #{tpu_custom_call.1} parent=11 // pred_region
          _
        $region24: #{tpu_custom_call.1} parent=11 // pred_fallthru
          _
        // Predicated region
        $region25: #{tpu_custom_call.1} parent=11 // pred_check
          %p359 = pneg %p113
        $region26: #{tpu_custom_call.1} parent=11 // pred_check_branch
          %361 = sbr.rel (%p359) target = $region28
        $region27: #{tpu_custom_call.1} parent=11 // pred_region
          %s363 = ssub.s32 256, 256
          %364 = vsyncadd [#allocation7], %s363
          %s365 = sshll.u32 [#allocation8], 4
          %s366 = int_to_ptr.vmem [resolvable:$true] %s365
          %371 = dma.hbm_to_vmem [thread:$0]  %s3, 256, %s366, [#allocation7], 64, 64, 4
        $region28: #{tpu_custom_call.1} parent=11 // pred_fallthru
          _
        // Predicated region
        $region29: #{tpu_custom_call.1} parent=11 // pred_check
          %p372 = pneg %p134
        $region30: #{tpu_custom_call.1} parent=11 // pred_check_branch
          %374 = sbr.rel (%p372) target = $region32
        $region31: #{tpu_custom_call.1} parent=11 // pred_region
          _
        $region32: #{tpu_custom_call.1} parent=11 // pred_fallthru
          _
        // Predicated region
        $region33: #{tpu_custom_call.1} parent=11 // pred_check
          %p375 = pneg %p155
        $region34: #{tpu_custom_call.1} parent=11 // pred_check_branch
          %377 = sbr.rel (%p375) target = $region36
        $region35: #{tpu_custom_call.1} parent=11 // pred_region
          %s379 = ssub.s32 1024, 1024
          %380 = vsyncadd [#allocation10], %s379
          %s381 = sshll.u32 [#allocation9], 4
          %s382 = int_to_ptr.vmem [resolvable:$true] %s381
          %387 = dma.hbm_to_vmem [thread:$0]  %s5, 1024, %s382, [#allocation10], 64, 64, 4
        $region36: #{tpu_custom_call.1} parent=11 // pred_fallthru
          _
        // Predicated region
        $region37: #{tpu_custom_call.1} parent=11 // pred_check
          %p388 = pneg %p176
        $region38: #{tpu_custom_call.1} parent=11 // pred_check_branch
          %390 = sbr.rel (%p388) target = $region40
        $region39: #{tpu_custom_call.1} parent=11 // pred_region
          _
        $region40: #{tpu_custom_call.1} parent=11 // pred_fallthru
          _
        // Predicated region
        $region41: #{tpu_custom_call.1} parent=11 // pred_check
          %p391 = pneg %p197
        $region42: #{tpu_custom_call.1} parent=11 // pred_check_branch
          %393 = sbr.rel (%p391) target = $region44
        $region43: #{tpu_custom_call.1} parent=11 // pred_region
          %s395 = ssub.s32 512, 512
          %396 = vsyncadd [#allocation10], %s395
          %s397 = sshll.u32 [#allocation11], 4
          %s398 = int_to_ptr.vmem [resolvable:$true] %s397
          %403 = dma.hbm_to_vmem [thread:$0]  %s7, 512, %s398, [#allocation10], 128, 128, 8
        $region44: #{tpu_custom_call.1} parent=11 // pred_fallthru
          _
        // Predicated region
        $region45: #{tpu_custom_call.1} parent=11 // pred_check
          %p404 = pneg %p218
        $region46: #{tpu_custom_call.1} parent=11 // pred_check_branch
          %406 = sbr.rel (%p404) target = $region48
        $region47: #{tpu_custom_call.1} parent=11 // pred_region
          _
        $region48: #{tpu_custom_call.1} parent=11 // pred_fallthru
          _
      $region12: #{tpu_custom_call.1} parent=5 // pred_fallthru
        _
      %p407 = scmp.lt.s32.totalorder %s29, 2
      // Predicated region
      $region49: #{tpu_custom_call.1} parent=5 // pred_check
        %p408 = pneg %p407
      $region50: #{tpu_custom_call.1} parent=5 // pred_check_branch
        %410 = sbr.rel (%p408) target = $region52
      $region51: #{tpu_custom_call.1} parent=5 // pred_region
        // Predicated region
        $region53: #{tpu_custom_call.1} parent=51 // pred_check
          %p411 = pneg %p238
        $region54: #{tpu_custom_call.1} parent=51 // pred_check_branch
          %413 = sbr.rel (%p411) target = $region56
        $region55: #{tpu_custom_call.1} parent=51 // pred_region
          %s414 = sand.u32 %s228, 1
          %s415 = scalar_lea.sflag [#allocation13], %s414
          %s416 = sand.u32 %s228, 1
          %s417 = smul.addr %s416, 128
          %s418 = scalar_lea.vmem [#allocation12], %s417
          %s420 = ssub.s32 2048, 2048
          %421 = vsyncadd %s415, %s420
          %s422 = smul.addr %s29, 64
          %s423 = scalar_lea.hbm %s9, %s422
          %s424 = sshll.u32 %s418, 4
          %s425 = int_to_ptr.vmem [resolvable:$true] %s424
          %430 = dma.hbm_to_vmem [thread:$0]  %s423, 2048, %s425, %s415, 128, 64, 4
        $region56: #{tpu_custom_call.1} parent=51 // pred_fallthru
          _
        // Predicated region
        $region57: #{tpu_custom_call.1} parent=51 // pred_check
          %p431 = pneg %p264
        $region58: #{tpu_custom_call.1} parent=51 // pred_check_branch
          %433 = sbr.rel (%p431) target = $region60
        $region59: #{tpu_custom_call.1} parent=51 // pred_region
          %p434 = scmp.lt.s32.totalorder %s29, 1
          %s435 = scalar_select %p434, %s29, 1
          %s436 = scalar_lea.vmem %s10, %s435
        $region60: #{tpu_custom_call.1} parent=51 // pred_fallthru
          _
      $region52: #{tpu_custom_call.1} parent=5 // pred_fallthru
        _
      %p437 = scmp.le.s32.totalorder 1, %s29
      %p438 = scmp.lt.s32.totalorder %s29, 3
      %p439 = pnand %p437, %p438
      %p440 = pneg %p439
      // Predicated region
      $region61: #{tpu_custom_call.1} parent=5 // pred_check
        _
      $region62: #{tpu_custom_call.1} parent=5 // pred_check_branch
        %442 = sbr.rel (%p439) target = $region64
      $region63: #{tpu_custom_call.1} parent=5 // pred_region
        %s443 = ssub.s32 %s29, 1
        // Predicated region
        $region65: #{tpu_custom_call.1} parent=63 // pred_check
          %p444 = pneg %p50
        $region66: #{tpu_custom_call.1} parent=63 // pred_check_branch
          %446 = sbr.rel (%p444) target = $region68
        $region67: #{tpu_custom_call.1} parent=63 // pred_region
          %447 = dma.done [#allocation4], 128
        $region68: #{tpu_custom_call.1} parent=63 // pred_fallthru
          _
        // Predicated region
        $region69: #{tpu_custom_call.1} parent=63 // pred_check
          %p448 = pneg %p71
        $region70: #{tpu_custom_call.1} parent=63 // pred_check_branch
          %450 = sbr.rel (%p448) target = $region72
        $region71: #{tpu_custom_call.1} parent=63 // pred_region
          %451 = dma.done [#allocation7], 256
        $region72: #{tpu_custom_call.1} parent=63 // pred_fallthru
          _
        // Predicated region
        $region73: #{tpu_custom_call.1} parent=63 // pred_check
          %p452 = pneg %p113
        $region74: #{tpu_custom_call.1} parent=63 // pred_check_branch
          %454 = sbr.rel (%p452) target = $region76
        $region75: #{tpu_custom_call.1} parent=63 // pred_region
          %455 = dma.done [#allocation7], 256
        $region76: #{tpu_custom_call.1} parent=63 // pred_fallthru
          _
        // Predicated region
        $region77: #{tpu_custom_call.1} parent=63 // pred_check
          %p456 = pneg %p155
        $region78: #{tpu_custom_call.1} parent=63 // pred_check_branch
          %458 = sbr.rel (%p456) target = $region80
        $region79: #{tpu_custom_call.1} parent=63 // pred_region
          %459 = dma.done [#allocation10], 1024
        $region80: #{tpu_custom_call.1} parent=63 // pred_fallthru
          _
        // Predicated region
        $region81: #{tpu_custom_call.1} parent=63 // pred_check
          %p460 = pneg %p197
        $region82: #{tpu_custom_call.1} parent=63 // pred_check_branch
          %462 = sbr.rel (%p460) target = $region84
        $region83: #{tpu_custom_call.1} parent=63 // pred_region
          %463 = dma.done [#allocation10], 512
        $region84: #{tpu_custom_call.1} parent=63 // pred_fallthru
          _
        %s464 = sand.u32 %s231, 1
        %s465 = scalar_lea.sflag [#allocation13], %s464
        %s466 = sand.u32 %s231, 1
        %s467 = smul.addr %s466, 128
        %s468 = scalar_lea.vmem [#allocation12], %s467
        // Predicated region
        $region85: #{tpu_custom_call.1} parent=63 // pred_check
          %p469 = pneg %p244
        $region86: #{tpu_custom_call.1} parent=63 // pred_check_branch
          %471 = sbr.rel (%p469) target = $region88
        $region87: #{tpu_custom_call.1} parent=63 // pred_region
          %472 = dma.done %s465, 2048
        $region88: #{tpu_custom_call.1} parent=63 // pred_fallthru
          _
        %p473 = pneg %p50
        %p474 = pneg %p47
        %p475 = pneg %p71
        %p476 = pneg %p68
        %p477 = pneg %p92
        %p478 = pneg %p89
        %p479 = pneg %p113
        %p480 = pneg %p110
        %p481 = pneg %p134
        %p482 = pneg %p131
        %p483 = pneg %p155
        %p484 = pneg %p152
        %p485 = pneg %p176
        %p486 = pneg %p173
        %p487 = pneg %p197
        %p488 = pneg %p194
        %p489 = pneg %p218
        %p490 = pneg %p215
        %s491 = sand.u32 %s231, 1
        %s492 = scalar_lea.sflag [#allocation13], %s491
        %s493 = sand.u32 %s231, 1
        %s494 = smul.addr %s493, 128
        %s495 = scalar_lea.vmem [#allocation12], %s494
        %p496 = pneg %p244
        %p497 = pneg %p241
        %p498 = scmp.lt.s32.totalorder %s34, 1
        %s499 = scalar_select %p498, %s34, 1
        %s500 = scalar_lea.vmem %s10, %s499
        %p501 = pneg %p270
        %p502 = pneg %p267
        %p503 = pneg %p291
        %p504 = pneg %p288
        %p505 = pneg %p317
        %p506 = pneg %p314
        %s507 = sand.u32 %s304, 1
        %s508 = scalar_lea.sflag [#allocation16], %s507
        %s509 = sand.u32 %s304, 1
        %s510 = smul.addr %s509, 8
        %s511 = scalar_lea.vmem [#allocation15], %s510
        %p512 = scmp.lt.s32.totalorder %s34, 1
        %s513 = scalar_select %p512, %s34, 1
        %s514 = scalar_lea.vmem %s10, %s513
        %p516 = scmp.eq.s32.totalorder %s34, 0
        // Predicated region
        $region89: #{tpu_custom_call.1} parent=63 // pred_check
          %p517 = pneg %p516
        $region90: #{tpu_custom_call.1} parent=63 // pred_check_branch
          %519 = sbr.rel (%p517) target = $region92
        $region91: #{tpu_custom_call.1} parent=63 // pred_region
          %v520 = vld [vmem:[#allocation3] sm:$0xff]
          %v521 = vpack.c.bf16 %v520, %v520
          %v522 = vld [vmem:[#allocation6] sm:$0xf]
          %v523 = vld [vmem:[#allocation6 + $0x4] sm:$0xf]
          %v524 = vld [vmem:[#allocation6 + $0x8] sm:$0xf]
          %v525 = vld [vmem:[#allocation6 + $0xc] sm:$0xf]
          %v526 = vld [vmem:[%s2] sm:$0x1]
          %v528 = vlaneseq
          %v529 = vshrl.u32 %v528, 7
          %v530 = vsub.s32 0, %v529
          %v531 = vrot.slane %v526, %v530
          %v537 = vunpack.c.l.b16 %v522
          %v538 = vunpack.c.l.b16 %v523
          %v539 = vunpack.c.l.b16 %v524
          %v540 = vunpack.c.l.b16 %v525
          %v541 = vpack.c.b16 %v538, %v537
          %v542 = vpack.c.b16 %v540, %v539
          %vm545 = vcmask 261120
          %v547 = vsel %vm545, %v521, 0
          %549 = vmatprep.subr.bf16.mxu0 0
          %550 = vmatpush1.bf16.msra.mxu0 0
          %551 = vmatprep.subr.bf16.mxu0 0
          %552 = vmatpush1.bf16.msra.mxu0 0
          %553 = vmatprep.subr.bf16.mxu0 0
          %554 = vmatpush1.bf16.msra.mxu0 0
          %555 = vmatprep.subr.bf16.mxu0 0
          %556 = vmatpush1.bf16.msra.mxu0 0
          %557 = vmatprep.subr.bf16.mxu0 0
          %558 = vmatpush1.bf16.msra.mxu0 0
          %559 = vmatprep.subr.bf16.mxu0 0
          %560 = vmatpush1.bf16.msra.mxu0 0
          %561 = vmatprep.subr.bf16.mxu0 0
          %562 = vmatpush1.bf16.msra.mxu0 %v542
          %563 = vmatprep.subr.bf16.mxu0 0
          %564 = vmatpush1.bf16.msra.mxu0 %v541
          %565 = vmatprep.subr.bf16.mxu0 0
          %566 = vmatpush2.bf16.msra.mxu0 0
          %567 = vmatprep.subr.bf16.mxu0 0
          %568 = vmatpush2.bf16.msra.mxu0 0
          %569 = vmatprep.subr.bf16.mxu0 0
          %570 = vmatpush2.bf16.msra.mxu0 0
          %571 = vmatprep.subr.bf16.mxu0 0
          %572 = vmatpush2.bf16.msra.mxu0 0
          %573 = vmatprep.subr.bf16.mxu0 0
          %574 = vmatpush2.bf16.msra.mxu0 0
          %575 = vmatprep.subr.bf16.mxu0 0
          %576 = vmatpush2.bf16.msra.mxu0 0
          %577 = vmatprep.subr.bf16.mxu0 0
          %578 = vmatpush2.bf16.msra.mxu0 0
          %579 = vmatprep.subr.bf16.mxu0 0
          %580 = vmatpush2.bf16.msra.mxu0 0
          %581 = vmatprep.mubr.bf16.mxu0 0
          %582 = vmatmul.mubr.bf16.gmra.mxu0 %v547
          %v583 = vpop.f32.mrf.mxu0
          %v584 = vadd.f32 %v531, %v583
          %v585 = vpop.f32.mrf.mxu0
          %v586 = vpop.f32.mrf.mxu0
          %v587 = vpop.f32.mrf.mxu0
          %588 = vdwg.mxu0
          %v589 = vmul.f32 %v584, 0.5
          %v590 = vmul.f32 %v584, 0.70710677
          %v591 = verf.f32.pop %v590
          %v592 = vadd.f32 %v591, 1.0
          %v593 = vmul.f32 %v589, %v592
          %v594 = vpack.c.bf16 %v593, %v593
          %v595 = vld [vmem:[#allocation8] sm:$0xf]
          %v596 = vld [vmem:[#allocation8 + $0x4] sm:$0xf]
          %v597 = vld [vmem:[#allocation8 + $0x8] sm:$0xf]
          %v598 = vld [vmem:[#allocation8 + $0xc] sm:$0xf]
          %v599 = vld [vmem:[%s4] sm:$0x1]
          %v601 = vlaneseq
          %v602 = vshrl.u32 %v601, 7
          %v603 = vsub.s32 0, %v602
          %v604 = vrot.slane %v599, %v603
          %v610 = vunpack.c.l.b16 %v595
          %v611 = vunpack.c.l.b16 %v596
          %v612 = vunpack.c.l.b16 %v597
          %v613 = vunpack.c.l.b16 %v598
          %v614 = vpack.c.b16 %v611, %v610
          %v615 = vpack.c.b16 %v613, %v612
          %v619 = vsel %vm545, %v594, 0
          %621 = vmatprep.subr.bf16.mxu0 0
          %622 = vmatpush1.bf16.msra.mxu0 0
          %623 = vmatprep.subr.bf16.mxu0 0
          %624 = vmatpush1.bf16.msra.mxu0 0
          %625 = vmatprep.subr.bf16.mxu0 0
          %626 = vmatpush1.bf16.msra.mxu0 0
          %627 = vmatprep.subr.bf16.mxu0 0
          %628 = vmatpush1.bf16.msra.mxu0 0
          %629 = vmatprep.subr.bf16.mxu0 0
          %630 = vmatpush1.bf16.msra.mxu0 0
          %631 = vmatprep.subr.bf16.mxu0 0
          %632 = vmatpush1.bf16.msra.mxu0 0
          %633 = vmatprep.subr.bf16.mxu0 0
          %634 = vmatpush1.bf16.msra.mxu0 %v615
          %635 = vmatprep.subr.bf16.mxu0 0
          %636 = vmatpush1.bf16.msra.mxu0 %v614
          %637 = vmatprep.subr.bf16.mxu0 0
          %638 = vmatpush2.bf16.msra.mxu0 0
          %639 = vmatprep.subr.bf16.mxu0 0
          %640 = vmatpush2.bf16.msra.mxu0 0
          %641 = vmatprep.subr.bf16.mxu0 0
          %642 = vmatpush2.bf16.msra.mxu0 0
          %643 = vmatprep.subr.bf16.mxu0 0
          %644 = vmatpush2.bf16.msra.mxu0 0
          %645 = vmatprep.subr.bf16.mxu0 0
          %646 = vmatpush2.bf16.msra.mxu0 0
          %647 = vmatprep.subr.bf16.mxu0 0
          %648 = vmatpush2.bf16.msra.mxu0 0
          %649 = vmatprep.subr.bf16.mxu0 0
          %650 = vmatpush2.bf16.msra.mxu0 0
          %651 = vmatprep.subr.bf16.mxu0 0
          %652 = vmatpush2.bf16.msra.mxu0 0
          %653 = vmatprep.mubr.bf16.mxu0 0
          %654 = vmatmul.mubr.bf16.gmra.mxu0 %v619
          %v655 = vpop.f32.mrf.mxu0
          %v656 = vadd.f32 %v604, %v655
          %v657 = vpop.f32.mrf.mxu0
          %v658 = vpop.f32.mrf.mxu0
          %v659 = vpop.f32.mrf.mxu0
          %660 = vdwg.mxu0
          %v661 = vmul.f32 %v656, 0.5
          %v662 = vmul.f32 %v656, 0.70710677
          %v663 = verf.f32.pop %v662
          %v664 = vadd.f32 %v663, 1.0
          %v665 = vmul.f32 %v661, %v664
          %v666 = vpack.c.bf16 %v665, %v665
          %v667 = vld [vmem:[#allocation9] sm:$0xf]
          %v668 = vld [vmem:[#allocation9 + $0x4] sm:$0xf]
          %v669 = vld [vmem:[#allocation9 + $0x8] sm:$0xf]
          %v670 = vld [vmem:[#allocation9 + $0xc] sm:$0xf]
          %v671 = vld [vmem:[#allocation9 + $0x10] sm:$0xf]
          %v672 = vld [vmem:[#allocation9 + $0x14] sm:$0xf]
          %v673 = vld [vmem:[#allocation9 + $0x18] sm:$0xf]
          %v674 = vld [vmem:[#allocation9 + $0x1c] sm:$0xf]
          %v675 = vld [vmem:[#allocation9 + $0x20] sm:$0xf]
          %v676 = vld [vmem:[#allocation9 + $0x24] sm:$0xf]
          %v677 = vld [vmem:[#allocation9 + $0x28] sm:$0xf]
          %v678 = vld [vmem:[#allocation9 + $0x2c] sm:$0xf]
          %v679 = vld [vmem:[#allocation9 + $0x30] sm:$0xf]
          %v680 = vld [vmem:[#allocation9 + $0x34] sm:$0xf]
          %v681 = vld [vmem:[#allocation9 + $0x38] sm:$0xf]
          %v682 = vld [vmem:[#allocation9 + $0x3c] sm:$0xf]
          %v683 = vld [vmem:[%s6] sm:$0x1]
          %v685 = vlaneseq
          %v686 = vshrl.u32 %v685, 7
          %v687 = vsub.s32 0, %v686
          %v688 = vrot.slane %v683, %v687
          %v706 = vunpack.c.l.b16 %v667
          %v707 = vunpack.c.l.b16 %v668
          %v708 = vunpack.c.l.b16 %v669
          %v709 = vunpack.c.l.b16 %v670
          %v710 = vunpack.c.l.b16 %v671
          %v711 = vunpack.c.l.b16 %v672
          %v712 = vunpack.c.l.b16 %v673
          %v713 = vunpack.c.l.b16 %v674
          %v714 = vunpack.c.l.b16 %v675
          %v715 = vunpack.c.l.b16 %v676
          %v716 = vunpack.c.l.b16 %v677
          %v717 = vunpack.c.l.b16 %v678
          %v718 = vunpack.c.l.b16 %v679
          %v719 = vunpack.c.l.b16 %v680
          %v720 = vunpack.c.l.b16 %v681
          %v721 = vunpack.c.l.b16 %v682
          %v722 = vpack.c.b16 %v707, %v706
          %v723 = vpack.c.b16 %v709, %v708
          %v724 = vpack.c.b16 %v711, %v710
          %v725 = vpack.c.b16 %v713, %v712
          %v726 = vpack.c.b16 %v715, %v714
          %v727 = vpack.c.b16 %v717, %v716
          %v728 = vpack.c.b16 %v719, %v718
          %v729 = vpack.c.b16 %v721, %v720
          %738 = vmatprep.subr.bf16.mxu0 0
          %739 = vmatpush1.bf16.msra.mxu0 %v729
          %740 = vmatprep.subr.bf16.mxu0 0
          %741 = vmatpush1.bf16.msra.mxu0 %v728
          %742 = vmatprep.subr.bf16.mxu0 0
          %743 = vmatpush1.bf16.msra.mxu0 %v727
          %744 = vmatprep.subr.bf16.mxu0 0
          %745 = vmatpush1.bf16.msra.mxu0 %v726
          %746 = vmatprep.subr.bf16.mxu0 0
          %747 = vmatpush1.bf16.msra.mxu0 %v725
          %748 = vmatprep.subr.bf16.mxu0 0
          %749 = vmatpush1.bf16.msra.mxu0 %v724
          %750 = vmatprep.subr.bf16.mxu0 0
          %751 = vmatpush1.bf16.msra.mxu0 %v723
          %752 = vmatprep.subr.bf16.mxu0 0
          %753 = vmatpush1.bf16.msra.mxu0 %v722
          %754 = vmatprep.subr.bf16.mxu0 0
          %755 = vmatpush2.bf16.msra.mxu0 0
          %756 = vmatprep.subr.bf16.mxu0 0
          %757 = vmatpush2.bf16.msra.mxu0 0
          %758 = vmatprep.subr.bf16.mxu0 0
          %759 = vmatpush2.bf16.msra.mxu0 0
          %760 = vmatprep.subr.bf16.mxu0 0
          %761 = vmatpush2.bf16.msra.mxu0 0
          %762 = vmatprep.subr.bf16.mxu0 0
          %763 = vmatpush2.bf16.msra.mxu0 0
          %764 = vmatprep.subr.bf16.mxu0 0
          %765 = vmatpush2.bf16.msra.mxu0 0
          %766 = vmatprep.subr.bf16.mxu0 0
          %767 = vmatpush2.bf16.msra.mxu0 0
          %768 = vmatprep.subr.bf16.mxu0 0
          %769 = vmatpush2.bf16.msra.mxu0 0
          %770 = vmatprep.mubr.bf16.mxu0 0
          %771 = vmatmul.mubr.bf16.gmra.mxu0 %v666
          %v772 = vpop.f32.mrf.mxu0
          %v773 = vadd.f32 %v688, %v772
          %v774 = vpop.f32.mrf.mxu0
          %v775 = vpop.f32.mrf.mxu0
          %v776 = vpop.f32.mrf.mxu0
          %777 = vdwg.mxu0
          %778 = vst [vmem:[#allocation14] sm:$0xff] %v773
          %v779 = vld [vmem:[#allocation11] sm:$0xff]
          %v780 = vld [vmem:[#allocation11 + $0x8] sm:$0xff]
          %v781 = vld [vmem:[#allocation11 + $0x10] sm:$0xff]
          %v782 = vld [vmem:[#allocation11 + $0x18] sm:$0xff]
          %v783 = vld [vmem:[%s8] sm:$0x3]
          %v785 = vlaneseq
          %v786 = vshrl.u32 %v785, 7
          %v787 = vsub.s32 0, %v786
          %v788 = vrot.slane %v783, %v787
          %v789 = vlaneseq
          %v790 = vshrl.u32 %v789, 7
          %v791 = vsub.s32 1, %v790
          %v792 = vrot.slane %v783, %v791
          %796 = vrot.lane.b32.xlu0 %v594, 96
          %v797 = vpop.permute.xlu0 %796
          %v802 = vunpack.c.l.b16 %v779
          %v803 = vunpack.c.h.b16 %v779
          %v804 = vunpack.c.l.b16 %v780
          %v805 = vunpack.c.h.b16 %v780
          %v806 = vunpack.c.l.b16 %v781
          %v807 = vunpack.c.h.b16 %v781
          %v808 = vunpack.c.l.b16 %v782
          %v809 = vunpack.c.h.b16 %v782
          %v810 = vpack.c.b16 %v804, %v802
          %v811 = vpack.c.b16 %v805, %v803
          %v812 = vpack.c.b16 %v808, %v806
          %v813 = vpack.c.b16 %v809, %v807
          %v819 = vsel %vm545, %v797, 0
          %821 = vmatprep.subr.bf16.mxu0 0
          %822 = vmatpush1.bf16.msra.mxu0 0
          %823 = vmatprep.subr.bf16.mxu0 0
          %824 = vmatpush1.bf16.msra.mxu0 0
          %825 = vmatprep.subr.bf16.mxu0 0
          %826 = vmatpush1.bf16.msra.mxu0 0
          %827 = vmatprep.subr.bf16.mxu0 0
          %828 = vmatpush1.bf16.msra.mxu0 0
          %829 = vmatprep.subr.bf16.mxu0 0
          %830 = vmatpush1.bf16.msra.mxu0 0
          %831 = vmatprep.subr.bf16.mxu0 0
          %832 = vmatpush1.bf16.msra.mxu0 0
          %833 = vmatprep.subr.bf16.mxu0 %v813
          %834 = vmatpush1.bf16.msra.mxu0 %v812
          %835 = vmatprep.subr.bf16.mxu0 %v811
          %836 = vmatpush1.bf16.msra.mxu0 %v810
          %837 = vmatprep.subr.bf16.mxu0 0
          %838 = vmatpush2.bf16.msra.mxu0 0
          %839 = vmatprep.subr.bf16.mxu0 0
          %840 = vmatpush2.bf16.msra.mxu0 0
          %841 = vmatprep.subr.bf16.mxu0 0
          %842 = vmatpush2.bf16.msra.mxu0 0
          %843 = vmatprep.subr.bf16.mxu0 0
          %844 = vmatpush2.bf16.msra.mxu0 0
          %845 = vmatprep.subr.bf16.mxu0 0
          %846 = vmatpush2.bf16.msra.mxu0 0
          %847 = vmatprep.subr.bf16.mxu0 0
          %848 = vmatpush2.bf16.msra.mxu0 0
          %849 = vmatprep.subr.bf16.mxu0 0
          %850 = vmatpush2.bf16.msra.mxu0 0
          %851 = vmatprep.subr.bf16.mxu0 0
          %852 = vmatpush2.bf16.msra.mxu0 0
          %853 = vmatprep.mubr.bf16.mxu0 0
          %854 = vmatmul.mubr.bf16.gmra.mxu0 %v819
          %v855 = vpop.f32.mrf.mxu0
          %v856 = vadd.f32 %v788, %v855
          %v857 = vpop.f32.mrf.mxu0
          %v858 = vadd.f32 %v792, %v857
          %v859 = vpop.f32.mrf.mxu0
          %v860 = vpop.f32.mrf.mxu0
          %861 = vdwg.mxu0
          %v862 = vmul.f32 %v856, 0.5
          %v863 = vmul.f32 %v858, 0.5
          %v864 = vmul.f32 %v856, 0.70710677
          %v865 = vmul.f32 %v858, 0.70710677
          %v866 = verf.f32.pop %v864
          %v867 = verf.f32.pop %v865
          %v868 = vadd.f32 %v866, 1.0
          %v869 = vadd.f32 %v867, 1.0
          %v870 = vmul.f32 %v862, %v868
          %v871 = vmul.f32 %v863, %v869
          %v872 = vpack.c.bf16 %v870, %v870
          %v873 = vpack.c.bf16 %v871, %v871
          %v876 = vunpack.c.l.b16 %v872
          %v877 = vunpack.c.l.b16 %v873
          %v878 = vpack.c.b16 %v877, %v876
          %880 = vst [vmem:[#allocation2] sm:$0xff] %v878
        $region92: #{tpu_custom_call.1} parent=63 // pred_fallthru
          _
        %v881 = vld [vmem:[#allocation2] sm:$0xff]
        %v882 = vld [vmem:[%s468] sm:$0xf]
        %v883 = vld [vmem:[%s468 + $0x4] sm:$0xf]
        %v884 = vld [vmem:[%s468 + $0x8] sm:$0xf]
        %v885 = vld [vmem:[%s468 + $0xc] sm:$0xf]
        %v886 = vld [vmem:[%s468 + $0x10] sm:$0xf]
        %v887 = vld [vmem:[%s468 + $0x14] sm:$0xf]
        %v888 = vld [vmem:[%s468 + $0x18] sm:$0xf]
        %v889 = vld [vmem:[%s468 + $0x1c] sm:$0xf]
        %v890 = vld [vmem:[%s468 + $0x20] sm:$0xf]
        %v891 = vld [vmem:[%s468 + $0x24] sm:$0xf]
        %v892 = vld [vmem:[%s468 + $0x28] sm:$0xf]
        %v893 = vld [vmem:[%s468 + $0x2c] sm:$0xf]
        %v894 = vld [vmem:[%s468 + $0x30] sm:$0xf]
        %v895 = vld [vmem:[%s468 + $0x34] sm:$0xf]
        %v896 = vld [vmem:[%s468 + $0x38] sm:$0xf]
        %v897 = vld [vmem:[%s468 + $0x3c] sm:$0xf]
        %v898 = vld [vmem:[%s468 + $0x40] sm:$0xf]
        %v899 = vld [vmem:[%s468 + $0x44] sm:$0xf]
        %v900 = vld [vmem:[%s468 + $0x48] sm:$0xf]
        %v901 = vld [vmem:[%s468 + $0x4c] sm:$0xf]
        %v902 = vld [vmem:[%s468 + $0x50] sm:$0xf]
        %v903 = vld [vmem:[%s468 + $0x54] sm:$0xf]
        %v904 = vld [vmem:[%s468 + $0x58] sm:$0xf]
        %v905 = vld [vmem:[%s468 + $0x5c] sm:$0xf]
        %v906 = vld [vmem:[%s468 + $0x60] sm:$0xf]
        %v907 = vld [vmem:[%s468 + $0x64] sm:$0xf]
        %v908 = vld [vmem:[%s468 + $0x68] sm:$0xf]
        %v909 = vld [vmem:[%s468 + $0x6c] sm:$0xf]
        %v910 = vld [vmem:[%s468 + $0x70] sm:$0xf]
        %v911 = vld [vmem:[%s468 + $0x74] sm:$0xf]
        %v912 = vld [vmem:[%s468 + $0x78] sm:$0xf]
        %v913 = vld [vmem:[%s468 + $0x7c] sm:$0xf]
        %v914 = vld [vmem:[%s514] sm:$0x1]
        %v916 = vlaneseq
        %v917 = vshrl.u32 %v916, 7
        %v918 = vsub.s32 0, %v917
        %v919 = vrot.slane %v914, %v918
        %v922 = vunpack.c.l.b16 %v881
        %v923 = vunpack.c.h.b16 %v881
        %v924 = vpack.c.b16 %v922, %v922
        %v925 = vpack.c.b16 %v923, %v923
        %v960 = vunpack.c.l.b16 %v882
        %v961 = vunpack.c.l.b16 %v883
        %v962 = vunpack.c.l.b16 %v884
        %v963 = vunpack.c.l.b16 %v885
        %v964 = vunpack.c.l.b16 %v886
        %v965 = vunpack.c.l.b16 %v887
        %v966 = vunpack.c.l.b16 %v888
        %v967 = vunpack.c.l.b16 %v889
        %v968 = vunpack.c.l.b16 %v890
        %v969 = vunpack.c.l.b16 %v891
        %v970 = vunpack.c.l.b16 %v892
        %v971 = vunpack.c.l.b16 %v893
        %v972 = vunpack.c.l.b16 %v894
        %v973 = vunpack.c.l.b16 %v895
        %v974 = vunpack.c.l.b16 %v896
        %v975 = vunpack.c.l.b16 %v897
        %v976 = vunpack.c.l.b16 %v898
        %v977 = vunpack.c.l.b16 %v899
        %v978 = vunpack.c.l.b16 %v900
        %v979 = vunpack.c.l.b16 %v901
        %v980 = vunpack.c.l.b16 %v902
        %v981 = vunpack.c.l.b16 %v903
        %v982 = vunpack.c.l.b16 %v904
        %v983 = vunpack.c.l.b16 %v905
        %v984 = vunpack.c.l.b16 %v906
        %v985 = vunpack.c.l.b16 %v907
        %v986 = vunpack.c.l.b16 %v908
        %v987 = vunpack.c.l.b16 %v909
        %v988 = vunpack.c.l.b16 %v910
        %v989 = vunpack.c.l.b16 %v911
        %v990 = vunpack.c.l.b16 %v912
        %v991 = vunpack.c.l.b16 %v913
        %v992 = vpack.c.b16 %v961, %v960
        %v993 = vpack.c.b16 %v963, %v962
        %v994 = vpack.c.b16 %v965, %v964
        %v995 = vpack.c.b16 %v967, %v966
        %v996 = vpack.c.b16 %v969, %v968
        %v997 = vpack.c.b16 %v971, %v970
        %v998 = vpack.c.b16 %v973, %v972
        %v999 = vpack.c.b16 %v975, %v974
        %v1000 = vpack.c.b16 %v977, %v976
        %v1001 = vpack.c.b16 %v979, %v978
        %v1002 = vpack.c.b16 %v981, %v980
        %v1003 = vpack.c.b16 %v983, %v982
        %v1004 = vpack.c.b16 %v985, %v984
        %v1005 = vpack.c.b16 %v987, %v986
        %v1006 = vpack.c.b16 %v989, %v988
        %v1007 = vpack.c.b16 %v991, %v990
        %1024 = vmatprep.subr.bf16.mxu0 0
        %1025 = vmatpush1.bf16.msra.mxu0 %v999
        %1026 = vmatprep.subr.bf16.mxu0 0
        %1027 = vmatpush1.bf16.msra.mxu0 %v998
        %1028 = vmatprep.subr.bf16.mxu0 0
        %1029 = vmatpush1.bf16.msra.mxu0 %v997
        %1030 = vmatprep.subr.bf16.mxu0 0
        %1031 = vmatpush1.bf16.msra.mxu0 %v996
        %1032 = vmatprep.subr.bf16.mxu0 0
        %1033 = vmatpush1.bf16.msra.mxu0 %v995
        %1034 = vmatprep.subr.bf16.mxu0 0
        %1035 = vmatpush1.bf16.msra.mxu0 %v994
        %1036 = vmatprep.subr.bf16.mxu0 0
        %1037 = vmatpush1.bf16.msra.mxu0 %v993
        %1038 = vmatprep.subr.bf16.mxu0 0
        %1039 = vmatpush1.bf16.msra.mxu0 %v992
        %1040 = vmatprep.subr.bf16.mxu0 0
        %1041 = vmatpush2.bf16.msra.mxu0 %v1007
        %1042 = vmatprep.subr.bf16.mxu0 0
        %1043 = vmatpush2.bf16.msra.mxu0 %v1006
        %1044 = vmatprep.subr.bf16.mxu0 0
        %1045 = vmatpush2.bf16.msra.mxu0 %v1005
        %1046 = vmatprep.subr.bf16.mxu0 0
        %1047 = vmatpush2.bf16.msra.mxu0 %v1004
        %1048 = vmatprep.subr.bf16.mxu0 0
        %1049 = vmatpush2.bf16.msra.mxu0 %v1003
        %1050 = vmatprep.subr.bf16.mxu0 0
        %1051 = vmatpush2.bf16.msra.mxu0 %v1002
        %1052 = vmatprep.subr.bf16.mxu0 0
        %1053 = vmatpush2.bf16.msra.mxu0 %v1001
        %1054 = vmatprep.subr.bf16.mxu0 0
        %1055 = vmatpush2.bf16.msra.mxu0 %v1000
        %1056 = vmatprep.mubr.bf16.mxu0 %v925
        %1057 = vmatmul.mubr.bf16.gmra.mxu0 %v924
        %v1058 = vpop.f32.mrf.mxu0
        %v1059 = vadd.f32 %v919, %v1058
        %v1060 = vpop.f32.mrf.mxu0
        %v1061 = vpop.f32.mrf.mxu0
        %v1062 = vpop.f32.mrf.mxu0
        %1063 = vdwg.mxu0
        %1064 = vst [vmem:[%s511] sm:$0xff] %v1059
        %s1065 = sand.u32 %s304, 1
        %s1066 = scalar_lea.sflag [#allocation16], %s1065
        %s1067 = sand.u32 %s304, 1
        %s1068 = smul.addr %s1067, 8
        %s1069 = scalar_lea.vmem [#allocation15], %s1068
        // Predicated region
        $region93: #{tpu_custom_call.1} parent=63 // pred_check
          %p1070 = pneg %p288
        $region94: #{tpu_custom_call.1} parent=63 // pred_check_branch
          %1072 = sbr.rel (%p1070) target = $region96
        $region95: #{tpu_custom_call.1} parent=63 // pred_region
          %s1074 = ssub.s32 128, 128
          %1075 = vsyncadd [#allocation5], %s1074
          %s1077 = sshll.u32 [#allocation14], 4
          %s1078 = int_to_ptr.vmem [resolvable:$true] %s1077
          %1080 = dma.vmem_to_hbm [thread:$0]  %s1078, 128, %s11, [#allocation5]
        $region96: #{tpu_custom_call.1} parent=63 // pred_fallthru
          _
        // Predicated region
        $region97: #{tpu_custom_call.1} parent=63 // pred_check
          %p1081 = pneg %p314
        $region98: #{tpu_custom_call.1} parent=63 // pred_check_branch
          %1083 = sbr.rel (%p1081) target = $region100
        $region99: #{tpu_custom_call.1} parent=63 // pred_region
          %s1085 = ssub.s32 128, 128
          %1086 = vsyncadd %s1066, %s1085
          %s1087 = smul.addr %s34, 128
          %s1088 = scalar_lea.hbm %s12, %s1087
          %s1090 = sshll.u32 %s1069, 4
          %s1091 = int_to_ptr.vmem [resolvable:$true] %s1090
          %1093 = dma.vmem_to_hbm [thread:$0]  %s1091, 128, %s1088, %s1066
        $region100: #{tpu_custom_call.1} parent=63 // pred_fallthru
          _
        // Predicated region
        $region101: #{tpu_custom_call.1} parent=63 // pred_check
          %p1094 = pneg %p288
        $region102: #{tpu_custom_call.1} parent=63 // pred_check_branch
          %1096 = sbr.rel (%p1094) target = $region104
        $region103: #{tpu_custom_call.1} parent=63 // pred_region
          %1097 = dma.done [#allocation5], 128
        $region104: #{tpu_custom_call.1} parent=63 // pred_fallthru
          _
      $region64: #{tpu_custom_call.1} parent=5 // pred_fallthru
        _
      %p1098 = scmp.le.s32.totalorder 2, %s29
      // Predicated region
      $region105: #{tpu_custom_call.1} parent=5 // pred_check
        %p1099 = pneg %p1098
      $region106: #{tpu_custom_call.1} parent=5 // pred_check_branch
        %1101 = sbr.rel (%p1099) target = $region108
      $region107: #{tpu_custom_call.1} parent=5 // pred_region
        %s1102 = ssub.s32 %s29, 2
        // Predicated region
        $region109: #{tpu_custom_call.1} parent=107 // pred_check
          %p1103 = pneg %p320
        $region110: #{tpu_custom_call.1} parent=107 // pred_check_branch
          %1105 = sbr.rel (%p1103) target = $region112
        $region111: #{tpu_custom_call.1} parent=107 // pred_region
          %s1106 = sand.u32 %s305, 1
          %s1107 = scalar_lea.sflag [#allocation16], %s1106
          %s1108 = sand.u32 %s305, 1
          %s1109 = smul.addr %s1108, 8
          %s1110 = scalar_lea.vmem [#allocation15], %s1109
          %1111 = dma.done %s1107, 128
        $region112: #{tpu_custom_call.1} parent=107 // pred_fallthru
          _
      $region108: #{tpu_custom_call.1} parent=5 // pred_fallthru
        _
    $region6: #{tpu_custom_call.1} parent=1 // loop_footer
      %s33 = sadd.s32 1, %s29
    $region7: #{tpu_custom_call.1} parent=1 // loop_footer_branch
      %28 = sbr.rel target = $region3
    $region8: #{tpu_custom_call.1} parent=1 // loop_exit
      _
    %1112 = vsyncpa [#allocation4], 1
    %s1113 = scalar_lea.sflag [#allocation4], 1
    %1114 = vsyncpa %s1113, 1
    %1115 = vsyncpa [#allocation7], 1
    %1116 = vsyncpa [#allocation10], 1
    %1117 = vsyncpa [#allocation13], 1
    %s1118 = scalar_lea.sflag [#allocation13], 1
    %1119 = vsyncpa %s1118, 1
    %1120 = vsyncpa [#allocation5], 1
    %s1121 = scalar_lea.sflag [#allocation5], 1
    %1122 = vsyncpa %s1121, 1
    %1123 = vsyncpa [#allocation16], 1
    %s1124 = scalar_lea.sflag [#allocation16], 1
    %1125 = vsyncpa %s1124, 1

</llo_original>
